<compile_context>
chip_gen: v7x
topology: tpu7x:2x2x1
jax: 0.10.0
libtpu: 0.0.40
codegen_flags: <defaults>
</compile_context>

<pallas_src>
import numpy as np
import jax
import jax.numpy as jnp
from jax.experimental import pallas as pl
from jax.experimental.pallas import tpu as pltpu


def _make_index(channels: int, direction: int, groups: int):
    """Replicates the index construction in _IndexSelect.__init__ exactly."""
    if channels % groups != 0:
        raise ValueError("Channels should be a multiple of the groups")
    index = [0] * channels
    count = 0
    if direction > 0:
        for gidx in range(groups):
            for nidx in range(gidx, channels, groups):
                index[count] = nidx
                count += 1
    else:
        for gidx in range(groups):
            for nidx in range(gidx, channels, groups):
                index[nidx] = count
                count += 1
    return tuple(index)


def _pick_t_tile(T: int, C: int, itemsize: int,
                 target_block_bytes: int = 2 * 1024 * 1024) -> int:
    """Largest multiple-of-128 divisor of T with C*T_tile*itemsize <= target.

    Falls back to the full T when T is small / not lane-aligned (the last block
    dim must then equal the full dimension).
    """
    if T % 128 != 0:
        return T
    max_tile = max(128, target_block_bytes // max(1, C * itemsize))
    if T <= max_tile:
        return T
    best = 128
    for k in range(1, T // 128 + 1):
        tile = 128 * k
        if T % tile == 0 and tile <= max_tile:
            best = tile
    return best


def _permute_kernel(x_ref, o_ref):
    # x_ref: (1, d0, d1, Tt), o_ref: (1, d1, d0, Tt).
    # Single whole-tile transpose of the two channel sub-axes (sublane shuffles
    # on the XLU path); the lane (T) dim is untouched, stores stay lane-dense.
    o_ref[...] = jnp.swapaxes(x_ref[...], 1, 2)


def index_select_channels(value: jax.Array, direction: int, groups: int,
                          *, t_tile: int | None = None) -> jax.Array:
    """out[n, c, t] = value[n, perm[c], t]  (== torch.index_select along dim 1)."""
    N, C, T = value.shape
    if C % groups != 0:
        raise ValueError("Channels should be a multiple of the groups")
    A = C // groups
    G = groups
    # direction > 0: (N, A, G, T) -> (N, G, A, T);  direction <= 0: the inverse.
    d0, d1 = (A, G) if direction > 0 else (G, A)

    if t_tile is None:
        t_tile = _pick_t_tile(T, C, jnp.dtype(value.dtype).itemsize)
    if T % t_tile != 0:
        raise ValueError("t_tile must divide T")
    if not (t_tile == T or t_tile % 128 == 0):
        raise ValueError("t_tile must be a multiple of 128 or the full T")
    num_t_blocks = T // t_tile

    # Free metadata reshape (no data movement at the XLA level).
    x4 = value.reshape(N, d0, d1, T)

    # NOTE: for tiny shapes (like the smoke test below) a plain jnp
    # reshape/swapaxes would be cheaper than a pallas_call; the Pallas path is
    # kept unconditional here so the kernel is always exercised.
    out4 = pl.pallas_call(
        _permute_kernel,
        out_shape=jax.ShapeDtypeStruct((N, d1, d0, T), value.dtype),
        grid_spec=pltpu.PrefetchScalarGridSpec(
            num_scalar_prefetch=0,
            grid=(N, num_t_blocks),
            in_specs=[pl.BlockSpec((1, d0, d1, t_tile), lambda n, t: (n, 0, 0, t))],
            out_specs=pl.BlockSpec((1, d1, d0, t_tile), lambda n, t: (n, 0, 0, t)),
        ),
        compiler_params=pltpu.CompilerParams(
            dimension_semantics=("parallel", "parallel"),
        ),
    )(x4)

    # Free metadata reshape back to (N, C, T).
    return out4.reshape(N, C, T)


def index_select_channels_ref(value: jax.Array, direction: int, groups: int) -> jax.Array:
    """Pure-JAX reference (mirrors torch.index_select(value, 1, index))."""
    perm = jnp.asarray(_make_index(value.shape[1], direction, groups), dtype=jnp.int32)
    return jnp.take(value, perm, axis=1)


if __name__ == "__main__":
    key = jax.random.PRNGKey(0)
    ok = True

    # (N, C, T, groups, forced_t_tile)
    cases = [
        (2, 8, 16, 4, None),    # tiny shapes consistent with the module
        (2, 8, 256, 4, 128),    # exercises the tiled-T (multi-block) path
        (2, 16, 128, 8, None),  # different group count, full-T lane-aligned tile
    ]

    for (N, C, T, groups, tt) in cases:
        key, sub = jax.random.split(key)
        x = jax.random.normal(sub, (N, C, T), dtype=jnp.float32)
        for direction in (1, -1):
            out = index_select_channels(x, direction, groups, t_tile=tt)
            out = jax.block_until_ready(out)
            ref = index_select_channels_ref(x, direction, groups)
            if not np.allclose(np.asarray(out), np.asarray(ref)):
                ok = False
                print(f"MISMATCH: shape={(N, C, T)} groups={groups} direction={direction}")

    if ok:
        print("KERNEL_OK")
</pallas_src>

<mosaic_0001>
module attributes {stable_mosaic.version = 11 : i64} {
  func.func @_permute_kernel(%arg0: i32, %arg1: i32, %arg2: memref<1x2x4x16xf32, #tpu.memory_space<vmem>>, %arg3: memref<1x4x2x16xf32, #tpu.memory_space<vmem>>) attributes {dimension_semantics = [#tpu.dimension_semantics<parallel>, #tpu.dimension_semantics<parallel>], iteration_bounds = array<i64: 2, 1>, scalar_prefetch = 0 : i64, scratch_operands = 0 : i64, tpu.core_type = #tpu.core_type<tc>, window_params = [{transform_indices = @transform_0, window_bounds = array<i64: 1, 2, 4, 16>}, {transform_indices = @transform_1, window_bounds = array<i64: 1, 4, 2, 16>}]} {
    %c0 = arith.constant 0 : index
    %c0_0 = arith.constant 0 : index
    %c0_1 = arith.constant 0 : index
    %c0_2 = arith.constant 0 : index
    %0 = vector.load %arg2[%c0, %c0_0, %c0_1, %c0_2] : memref<1x2x4x16xf32, #tpu.memory_space<vmem>>, vector<1x2x4x16xf32>
    %1 = tpu.transpose %0, [0, 2, 1, 3] : vector<1x2x4x16xf32> -> vector<1x4x2x16xf32>
    %c0_3 = arith.constant 0 : index
    %c0_4 = arith.constant 0 : index
    %c0_5 = arith.constant 0 : index
    %c0_6 = arith.constant 0 : index
    %2 = vector.load %arg3[%c0_3, %c0_4, %c0_5, %c0_6] : memref<1x4x2x16xf32, #tpu.memory_space<vmem>>, vector<1x4x2x16xf32>
    tpu.vector_store %arg3[%c0_3, %c0_4, %c0_5, %c0_6], %1 {strides = array<i32>} : memref<1x4x2x16xf32, #tpu.memory_space<vmem>>, vector<1x4x2x16xf32>,
    return
  }
  func.func @transform_0(%arg0: i32, %arg1: i32) -> (i32, i32, i32, i32) {
    %c0_i32 = arith.constant 0 : i32
    %c0_i32_0 = arith.constant 0 : i32
    %c0_i32_1 = arith.constant 0 : i32
    return %arg0, %c0_i32, %c0_i32_0, %arg1 : i32, i32, i32, i32
  }
  func.func @transform_1(%arg0: i32, %arg1: i32) -> (i32, i32, i32, i32) {
    %c0_i32 = arith.constant 0 : i32
    %c0_i32_0 = arith.constant 0 : i32
    %c0_i32_1 = arith.constant 0 : i32
    return %arg0, %c0_i32, %c0_i32_0, %arg1 : i32, i32, i32, i32
  }
}

</mosaic_0001>

<llo_original>
// kernel: tpu_custom_call.1
$region0: #{tpu_custom_call.1}
  #allocation0 [shape = 'u32[]', space=smem, size = 0x4, offset = 0x4, fixed_abs, tag = 'smem constant byte address 0x4 - core index']
  #allocation1 [shape = 'u32[144,128]{1,0:T(1,128)}', space=vmem, size = 0x12000, scoped, tag = 'internal scratch']
  %s0 = inlined_call_operand.hbm [shape: f32[2,2,4,16], index: 0, kind: input, shape index: {}]
  %s1 = inlined_call_operand.hbm [shape: f32[2,4,2,16], index: 1, kind: output, shape index: {}]
  %s2 = sld [smem:[#allocation0]]
  $region41: #{tpu_custom_call.1} parent=0
    _
  %s4 = ssub.s32 1, %s2
  %s5 = scalar_select 0, %s4, %s2
  $region1: #{tpu_custom_call.1} parent=0
    #allocation2 [shape = 'u8[8192]{0}', space=vmem, size = 0x2000, scoped, tag = 'input window, operand 0']
    #allocation3 [shape = 's32[2]{0}', space=sflag, size = 0x8, scoped, tag = 'scoped memory for tpu_custom_call.1']
    #allocation4 [shape = 's32[2]{0}', space=sflag, size = 0x8, scoped, tag = 'scoped memory for tpu_custom_call.1']
    #allocation5 [shape = 'u8[8192]{0}', space=vmem, size = 0x2000, scoped, tag = 'output window, operand 0']
    %6 = vsyncpa [#allocation3], 0
    %s7 = scalar_lea.sflag [#allocation3], 1
    %8 = vsyncpa %s7, 0
    %9 = vsyncpa [#allocation4], 0
    %s10 = scalar_lea.sflag [#allocation4], 1
    %11 = vsyncpa %s10, 0
    loop: start=0, step=1, limit=4
    $region2: #{tpu_custom_call.1} parent=1 // loop_pre_header
      _
    $region3: #{tpu_custom_call.1} parent=1 // loop_header
      %s13 = sphi 0, %s17
      %p14 = scmp.ge.s32.totalorder %s13, 4
      %s20 = sphi 0, %s32
      %s21 = sphi 0, %s28
      %s22 = sphi 0, %s20
      %s23 = sphi 0, %s21
      %s24 = sphi 0, %s22
      %s25 = sphi 0, %s23
      %s37 = sphi 0, %s39
      %s40 = sphi 0, %s37
      %s41 = sphi 0, %s40
      %s57 = sphi 0, %s41
      %s65 = sphi 0, %s67
      %s68 = sphi 0, %s65
      %s69 = sphi 0, %s68
      %s85 = sphi 0, %s69
    $region4: #{tpu_custom_call.1} parent=1 // loop_header_branch
      %16 = sbr.rel (%p14) target = $region8
    $region5: #{tpu_custom_call.1} parent=1 // loop_body
      %s18 = ssub.s32 %s13, 1
      %s19 = ssub.s32 %s13, 2
      %s26 = sadd.s32 1, %s21
      %p27 = scmp.ge.s32.totalorder %s26, 1
      %s28 = scalar_select %p27, 0, %s26
      %s29 = sadd.s32 1, %s20
      %s30 = scalar_select %p27, %s29, %s20
      %p31 = scmp.ge.s32.totalorder %s30, 2
      %s32 = scalar_select %p31, 0, %s30
      %s33 = ssub.s32 %s20, %s32
      %s34 = ssub.s32 %s21, %s28
      %s35 = sor.u32 %s33, %s34
      %p36 = scmp.eq.s32.totalorder %s35, 0
      %s38 = sadd.s32 %s37, 1
      %s39 = scalar_select %p36, %s37, %s38
      %p42 = pneg %p36
      %p43 = scmp.eq.s32.totalorder %s13, 1
      %p44 = por %p42, %p43
      %p45 = scmp.ne.s32.totalorder %s37, %s40
      %p46 = scmp.eq.s32.totalorder %s13, 0
      %p47 = por %p45, %p46
      %p48 = scmp.ne.s32.totalorder %s37, %s40
      %p49 = scmp.eq.s32.totalorder %s18, 1
      %p50 = por %p48, %p49
      %p51 = scmp.ne.s32.totalorder %s40, %s41
      %p52 = scmp.eq.s32.totalorder %s18, 0
      %p53 = por %p51, %p52
      %p54 = scmp.ne.s32.totalorder %s40, %s41
      %p55 = scmp.eq.s32.totalorder %s19, 1
      %p56 = por %p54, %p55
      %p58 = scmp.ne.s32.totalorder %s41, %s57
      %p59 = scmp.eq.s32.totalorder %s19, 0
      %p60 = por %p58, %p59
      %s61 = ssub.s32 %s20, %s32
      %s62 = ssub.s32 %s21, %s28
      %s63 = sor.u32 %s61, %s62
      %p64 = scmp.eq.s32.totalorder %s63, 0
      %s66 = sadd.s32 %s65, 1
      %s67 = scalar_select %p64, %s65, %s66
      %p70 = pneg %p64
      %p71 = scmp.eq.s32.totalorder %s13, 1
      %p72 = por %p70, %p71
      %p73 = scmp.ne.s32.totalorder %s65, %s68
      %p74 = scmp.eq.s32.totalorder %s13, 0
      %p75 = por %p73, %p74
      %p76 = scmp.ne.s32.totalorder %s65, %s68
      %p77 = scmp.eq.s32.totalorder %s18, 1
      %p78 = por %p76, %p77
      %p79 = scmp.ne.s32.totalorder %s68, %s69
      %p80 = scmp.eq.s32.totalorder %s18, 0
      %p81 = por %p79, %p80
      %p82 = scmp.ne.s32.totalorder %s68, %s69
      %p83 = scmp.eq.s32.totalorder %s19, 1
      %p84 = por %p82, %p83
      %p86 = scmp.ne.s32.totalorder %s69, %s85
      %p87 = scmp.eq.s32.totalorder %s19, 0
      %p88 = por %p86, %p87
      %p89 = scmp.le.s32.totalorder 1, %s13
      %p90 = scmp.lt.s32.totalorder %s13, 3
      %p91 = pnand %p89, %p90
      %p92 = pneg %p91
      // Predicated region
      $region9: #{tpu_custom_call.1} parent=5 // pred_check
        _
      $region10: #{tpu_custom_call.1} parent=5 // pred_check_branch
        %94 = sbr.rel (%p91) target = $region12
      $region11: #{tpu_custom_call.1} parent=5 // pred_region
        %s95 = ssub.s32 %s13, 1
      $region12: #{tpu_custom_call.1} parent=5 // pred_fallthru
        _
      %p96 = scmp.lt.s32.totalorder %s13, 2
      // Predicated region
      $region13: #{tpu_custom_call.1} parent=5 // pred_check
        %p97 = pneg %p96
      $region14: #{tpu_custom_call.1} parent=5 // pred_check_branch
        %99 = sbr.rel (%p97) target = $region16
      $region15: #{tpu_custom_call.1} parent=5 // pred_region
        // Predicated region
        $region17: #{tpu_custom_call.1} parent=15 // pred_check
          %p100 = pneg %p47
        $region18: #{tpu_custom_call.1} parent=15 // pred_check_branch
          %102 = sbr.rel (%p100) target = $region20
        $region19: #{tpu_custom_call.1} parent=15 // pred_region
          %s103 = sand.u32 %s37, 1
          %s104 = scalar_lea.sflag [#allocation3], %s103
          %s105 = sand.u32 %s37, 1
          %s106 = smul.addr %s105, 8
          %s107 = scalar_lea.vmem [#allocation2], %s106
          %s109 = ssub.s32 128, 128
          %110 = vsyncadd %s104, %s109
          %s111 = smul.addr %s20, 2
          %s112 = sadd.s32 %s21, %s111
          %s113 = smul.addr %s112, 64
          %s114 = scalar_lea.hbm %s0, %s113
          %s115 = sshll.u32 %s107, 4
          %s116 = int_to_ptr.vmem [resolvable:$true] %s115
          %121 = dma.hbm_to_vmem [thread:$0]  %s114, 128, %s116, %s104, 64, 64, 4
        $region20: #{tpu_custom_call.1} parent=15 // pred_fallthru
          _
      $region16: #{tpu_custom_call.1} parent=5 // pred_fallthru
        _
      %p122 = scmp.le.s32.totalorder 1, %s13
      %p123 = scmp.lt.s32.totalorder %s13, 3
      %p124 = pnand %p122, %p123
      %p125 = pneg %p124
      // Predicated region
      $region21: #{tpu_custom_call.1} parent=5 // pred_check
        _
      $region22: #{tpu_custom_call.1} parent=5 // pred_check_branch
        %127 = sbr.rel (%p124) target = $region24
      $region23: #{tpu_custom_call.1} parent=5 // pred_region
        %s128 = ssub.s32 %s13, 1
        %s129 = sand.u32 %s40, 1
        %s130 = scalar_lea.sflag [#allocation3], %s129
        %s131 = sand.u32 %s40, 1
        %s132 = smul.addr %s131, 8
        %s133 = scalar_lea.vmem [#allocation2], %s132
        // Predicated region
        $region25: #{tpu_custom_call.1} parent=23 // pred_check
          %p134 = pneg %p53
        $region26: #{tpu_custom_call.1} parent=23 // pred_check_branch
          %136 = sbr.rel (%p134) target = $region28
        $region27: #{tpu_custom_call.1} parent=23 // pred_region
          %137 = dma.done %s130, 128
        $region28: #{tpu_custom_call.1} parent=23 // pred_fallthru
          _
        %s138 = sand.u32 %s40, 1
        %s139 = scalar_lea.sflag [#allocation3], %s138
        %s140 = sand.u32 %s40, 1
        %s141 = smul.addr %s140, 8
        %s142 = scalar_lea.vmem [#allocation2], %s141
        %p143 = pneg %p53
        %p144 = pneg %p50
        %p145 = pneg %p81
        %p146 = pneg %p78
        %s147 = sand.u32 %s68, 1
        %s148 = scalar_lea.sflag [#allocation4], %s147
        %s149 = sand.u32 %s68, 1
        %s150 = smul.addr %s149, 8
        %s151 = scalar_lea.vmem [#allocation5], %s150
        %v152 = vld [vmem:[%s133] sm:$0xf]
        %v154 = vunpack.c.l.s4 1983009808
        %v155 = vunpack.c.0.s8 %v154
        %v156 = vlaneseq
        %v157 = vshrl.u32 %v156, 7
        %v158 = vsub.s32 %v155, %v157
        %v159 = vrot.slane %v152, %v158
        %v160 = vld [vmem:[%s133 + $0x4] sm:$0xf]
        %v162 = vunpack.c.l.s4 1983009808
        %v163 = vunpack.c.0.s8 %v162
        %v164 = vlaneseq
        %v165 = vshrl.u32 %v164, 7
        %v166 = vsub.s32 %v163, %v165
        %v167 = vrot.slane %v160, %v166
        %v168 = vcombine.low %v159, %v167
        %v169 = vcombine.high %v159, %v167
        %v171 = vunpack.c.l.s4 1934713408
        %v172 = vunpack.c.0.s8 %v171
        %v173 = vlaneseq
        %v174 = vshrl.u32 %v173, 7
        %v175 = vsub.s32 %v172, %v174
        %v176 = vrot.slane %v168, %v175
        %v178 = vunpack.c.l.s4 1934713408
        %v179 = vunpack.c.0.s8 %v178
        %v180 = vlaneseq
        %v181 = vshrl.u32 %v180, 7
        %v182 = vsub.s32 %v179, %v181
        %v183 = vrot.slane %v169, %v182
        %v184 = vcombine.high %v176, 0.0
        %v185 = vcombine.high %v183, 0.0
        %vm186 = vcmask 123904
        %187 = vst.msk [vmem:[%s151] sm:$0x3] %vm186, %v176
        %188 = vst.msk [vmem:[%s151 + $0x2] sm:$0x3] %vm186, %v184
        %189 = vst.msk [vmem:[%s151 + $0x4] sm:$0x3] %vm186, %v183
        %190 = vst.msk [vmem:[%s151 + $0x6] sm:$0x3] %vm186, %v185
        %s191 = sand.u32 %s68, 1
        %s192 = scalar_lea.sflag [#allocation4], %s191
        %s193 = sand.u32 %s68, 1
        %s194 = smul.addr %s193, 8
        %s195 = scalar_lea.vmem [#allocation5], %s194
        // Predicated region
        $region29: #{tpu_custom_call.1} parent=23 // pred_check
          %p196 = pneg %p78
        $region30: #{tpu_custom_call.1} parent=23 // pred_check_branch
          %198 = sbr.rel (%p196) target = $region32
        $region31: #{tpu_custom_call.1} parent=23 // pred_region
          %s200 = ssub.s32 128, 128
          %201 = vsyncadd %s192, %s200
          %s202 = smul.addr %s22, 4
          %s203 = sadd.s32 %s23, %s202
          %s204 = smul.addr %s203, 32
          %s205 = scalar_lea.hbm %s1, %s204
          %s206 = sshll.u32 %s195, 4
          %s207 = int_to_ptr.vmem [resolvable:$true] %s206
          %212 = dma.vmem_to_hbm [thread:$0]  %s207, 128, %s205, %s192, 32, 32, 2
        $region32: #{tpu_custom_call.1} parent=23 // pred_fallthru
          _
      $region24: #{tpu_custom_call.1} parent=5 // pred_fallthru
        _
      %p213 = scmp.le.s32.totalorder 2, %s13
      // Predicated region
      $region33: #{tpu_custom_call.1} parent=5 // pred_check
        %p214 = pneg %p213
      $region34: #{tpu_custom_call.1} parent=5 // pred_check_branch
        %216 = sbr.rel (%p214) target = $region36
      $region35: #{tpu_custom_call.1} parent=5 // pred_region
        %s217 = ssub.s32 %s13, 2
        // Predicated region
        $region37: #{tpu_custom_call.1} parent=35 // pred_check
          %p218 = pneg %p84
        $region38: #{tpu_custom_call.1} parent=35 // pred_check_branch
          %220 = sbr.rel (%p218) target = $region40
        $region39: #{tpu_custom_call.1} parent=35 // pred_region
          %s221 = sand.u32 %s69, 1
          %s222 = scalar_lea.sflag [#allocation4], %s221
          %s223 = sand.u32 %s69, 1
          %s224 = smul.addr %s223, 8
          %s225 = scalar_lea.vmem [#allocation5], %s224
          %226 = dma.done %s222, 128
        $region40: #{tpu_custom_call.1} parent=35 // pred_fallthru
          _
      $region36: #{tpu_custom_call.1} parent=5 // pred_fallthru
        _
    $region6: #{tpu_custom_call.1} parent=1 // loop_footer
      %s17 = sadd.s32 1, %s13
    $region7: #{tpu_custom_call.1} parent=1 // loop_footer_branch
      %12 = sbr.rel target = $region3
    $region8: #{tpu_custom_call.1} parent=1 // loop_exit
      _
    %227 = vsyncpa [#allocation3], 1
    %s228 = scalar_lea.sflag [#allocation3], 1
    %229 = vsyncpa %s228, 1
    %230 = vsyncpa [#allocation4], 1
    %s231 = scalar_lea.sflag [#allocation4], 1
    %232 = vsyncpa %s231, 1

</llo_original>
